<compile_context>
chip_gen: v7x
topology: tpu7x:2x2x1
jax: 0.10.0
libtpu: 0.0.40
codegen_flags: <defaults>
</compile_context>

<pallas_src>
import functools

import jax
import jax.numpy as jnp
from jax import lax
from jax.experimental import pallas as pl
from jax.experimental.pallas import tpu as pltpu


def _contrastive_loss_kernel(x0_ref, x1_ref, y_ref, partial_ref, *,
                             margin, block_rows, batch):
    i = pl.program_id(0)

    x0 = x0_ref[...].astype(jnp.float32)          # (TB, D)
    x1 = x1_ref[...].astype(jnp.float32)          # (TB, D)
    y = y_ref[...].astype(jnp.float32)            # (TB, 1)

    diff = x0 - x1
    dist_sq = jnp.sum(diff * diff, axis=1, keepdims=True)   # (TB, 1)  XLU reduce
    dist = jnp.sqrt(dist_sq)                                 # EUP
    mdist = jnp.maximum(margin - dist, 0.0)                  # clamp(min=0)
    loss = y * dist_sq + (1.0 - y) * (mdist * mdist)         # (TB, 1)

    # Mask rows that fall past the true batch size (overhanging last tile).
    row = i * block_rows + lax.broadcasted_iota(jnp.int32, (block_rows, 1), 0)
    loss = jnp.where(row < batch, loss, 0.0)

    partial_ref[0, 0] = jnp.sum(loss)


def contrastive_loss(x0, x1, y, margin=1.0, block_rows=None):
    """JAX/Pallas equivalent of ContrastiveLoss(margin).forward(x0, x1, y).

    x0, x1: (B, D) float arrays (f32 or bf16 -- no host-side upcast needed).
    y:      (B,)   float array of 0/1 labels.
    Returns a scalar float32 loss.
    """
    B, D = x0.shape
    y2d = y.reshape(B, 1)

    if block_rows is None:
        # Full batch if it's small, else a 512-row tile (multiple of 8):
        # with double-buffering this keeps 2 inputs x 2 buffers well inside
        # the default scoped-VMEM limit even on v7x (64 MiB physical VMEM).
        block_rows = B if B <= 512 else 512
    if block_rows != B:
        assert block_rows % 8 == 0, "block_rows must be a multiple of 8"
    num_tiles = pl.cdiv(B, block_rows)

    kernel = functools.partial(
        _contrastive_loss_kernel,
        margin=float(margin),
        block_rows=block_rows,
        batch=B,
    )

    in_bytes = (x0.size * x0.dtype.itemsize
                + x1.size * x1.dtype.itemsize
                + y2d.size * y2d.dtype.itemsize)
    cost = pl.CostEstimate(
        flops=3 * B * D + 6 * B,       # sub, mul, row-reduce + epilogue
        transcendentals=B,             # one sqrt per row
        bytes_accessed=in_bytes + num_tiles * 4,
    )

    partials = pl.pallas_call(
        kernel,
        out_shape=jax.ShapeDtypeStruct((num_tiles, 1), jnp.float32),
        grid=(num_tiles,),
        in_specs=[
            pl.BlockSpec((block_rows, D), lambda i: (i, 0)),   # x0 tile
            pl.BlockSpec((block_rows, D), lambda i: (i, 0)),   # x1 tile
            pl.BlockSpec((block_rows, 1), lambda i: (i, 0)),   # y tile
        ],
        out_specs=pl.BlockSpec((1, 1), lambda i: (i, 0),
                               memory_space=pltpu.SMEM),
        compiler_params=pltpu.CompilerParams(
            dimension_semantics=("parallel",),
        ),
        cost_estimate=cost,
    )(x0, x1, y2d)

    # Final reduction + folded (1/2)/B scale in the wrapper (single multiply).
    return jnp.sum(partials) * (0.5 / B)


def _reference(x0, x1, y, margin=1.0):
    # Pure-JAX reference mirroring the PyTorch forward exactly.
    x0 = x0.astype(jnp.float32)
    x1 = x1.astype(jnp.float32)
    y = y.astype(jnp.float32)
    diff = x0 - x1
    dist_sq = jnp.sum(diff ** 2, axis=1)
    dist = jnp.sqrt(dist_sq)
    mdist = jnp.maximum(margin - dist, 0.0)
    loss = y * dist_sq + (1.0 - y) * mdist ** 2
    return jnp.sum(loss) / 2.0 / x0.shape[0]


if __name__ == "__main__":
    key = jax.random.PRNGKey(0)
    k0, k1, ky = jax.random.split(key, 3)

    # Small, lane-dense test shape: B=8 rows, D=128 features.
    B, D = 8, 128
    x0 = jax.random.normal(k0, (B, D), dtype=jnp.float32)
    x1 = jax.random.normal(k1, (B, D), dtype=jnp.float32)
    y = jax.random.bernoulli(ky, p=0.5, shape=(B,)).astype(jnp.float32)

    loss = contrastive_loss(x0, x1, y, margin=1.0)
    jax.block_until_ready(loss)
    ref = _reference(x0, x1, y, margin=1.0)
    assert jnp.allclose(loss, ref, rtol=1e-5, atol=1e-5), (loss, ref)

    # Exercise the tiled + masked path (B=24 not divisible by block_rows=16).
    B2, D2 = 24, 128
    k0b, k1b, kyb = jax.random.split(jax.random.PRNGKey(1), 3)
    x0b = jax.random.normal(k0b, (B2, D2), dtype=jnp.float32)
    x1b = jax.random.normal(k1b, (B2, D2), dtype=jnp.float32)
    yb = jax.random.bernoulli(kyb, p=0.5, shape=(B2,)).astype(jnp.float32)

    loss_b = contrastive_loss(x0b, x1b, yb, margin=1.0, block_rows=16)
    jax.block_until_ready(loss_b)
    ref_b = _reference(x0b, x1b, yb, margin=1.0)
    assert jnp.allclose(loss_b, ref_b, rtol=1e-5, atol=1e-5), (loss_b, ref_b)

    # bf16 inputs: no host-side upcast, kernel casts in VMEM.
    loss_bf16 = contrastive_loss(x0b.astype(jnp.bfloat16),
                                 x1b.astype(jnp.bfloat16), yb, margin=1.0,
                                 block_rows=16)
    jax.block_until_ready(loss_bf16)
    assert jnp.allclose(loss_bf16, ref_b, rtol=2e-2, atol=2e-2), (loss_bf16, ref_b)

    print("KERNEL_OK")
</pallas_src>

<mosaic_0001>
module attributes {stable_mosaic.version = 11 : i64} {
  func.func @_contrastive_loss_kernel(%arg0: i32, %arg1: memref<8x128xf32, #tpu.memory_space<vmem>>, %arg2: memref<8x128xf32, #tpu.memory_space<vmem>>, %arg3: memref<8x1xf32, #tpu.memory_space<vmem>>, %arg4: memref<1x1xf32, #tpu.memory_space<smem>>) attributes {dimension_semantics = [#tpu.dimension_semantics<parallel>], iteration_bounds = array<i64: 1>, scalar_prefetch = 0 : i64, scratch_operands = 0 : i64, tpu.core_type = #tpu.core_type<tc>, window_params = [{transform_indices = @transform_0, window_bounds = array<i64: 8, 128>}, {transform_indices = @transform_1, window_bounds = array<i64: 8, 128>}, {transform_indices = @transform_2, window_bounds = array<i64: 8, 1>}, {transform_indices = @transform_3, window_bounds = array<i64: 1, 1>}]} {
    %c0 = arith.constant 0 : index
    %c0_0 = arith.constant 0 : index
    %0 = vector.load %arg1[%c0, %c0_0] : memref<8x128xf32, #tpu.memory_space<vmem>>, vector<8x128xf32>
    %c0_1 = arith.constant 0 : index
    %c0_2 = arith.constant 0 : index
    %1 = vector.load %arg2[%c0_1, %c0_2] : memref<8x128xf32, #tpu.memory_space<vmem>>, vector<8x128xf32>
    %c0_3 = arith.constant 0 : index
    %c0_4 = arith.constant 0 : index
    %2 = vector.load %arg3[%c0_3, %c0_4] : memref<8x1xf32, #tpu.memory_space<vmem>>, vector<8x1xf32>
    %3 = arith.subf %0, %1 : vector<8x128xf32>
    %4 = arith.mulf %3, %3 : vector<8x128xf32>
    %cst = arith.constant dense<0.000000e+00> : vector<8xf32>
    %5 = vector.multi_reduction <add>, %4, %cst [1] : vector<8x128xf32> to vector<8xf32>
    %6 = vector.shape_cast %5 : vector<8xf32> to vector<8x1xf32>
    %7 = math.sqrt %6 : vector<8x1xf32>
    %cst_5 = arith.constant 1.000000e+00 : f32
    %8 = vector.broadcast %cst_5 : f32 to vector<8x1xf32>
    %9 = arith.subf %8, %7 : vector<8x1xf32>
    %cst_6 = arith.constant 0.000000e+00 : f32
    %10 = vector.broadcast %cst_6 : f32 to vector<8x1xf32>
    %11 = arith.maximumf %9, %10 : vector<8x1xf32>
    %12 = arith.mulf %2, %6 : vector<8x1xf32>
    %cst_7 = arith.constant 1.000000e+00 : f32
    %13 = vector.broadcast %cst_7 : f32 to vector<8x1xf32>
    %14 = arith.subf %13, %2 : vector<8x1xf32>
    %15 = arith.mulf %11, %11 : vector<8x1xf32>
    %16 = arith.mulf %14, %15 : vector<8x1xf32>
    %17 = arith.addf %12, %16 : vector<8x1xf32>
    %c8_i32 = arith.constant 8 : i32
    %18 = arith.muli %arg0, %c8_i32 : i32
    %19 = tpu.iota {dimensions = array<i32: 0>} : vector<8x1xi32>
    %20 = vector.broadcast %18 : i32 to vector<8x1xi32>
    %21 = arith.addi %20, %19 : vector<8x1xi32>
    %c8_i32_8 = arith.constant 8 : i32
    %22 = vector.broadcast %c8_i32_8 : i32 to vector<8x1xi32>
    %23 = arith.cmpi slt, %21, %22 : vector<8x1xi32>
    %cst_9 = arith.constant 0.000000e+00 : f32
    %24 = vector.broadcast %cst_9 : f32 to vector<8x1xf32>
    %25 = arith.select %23, %17, %24 : vector<8x1xi1>, vector<8x1xf32>
    %26 = vector.shape_cast %25 : vector<8x1xf32> to vector<1x8x1xf32>
    %cst_10 = arith.constant dense<0.000000e+00> : vector<1xf32>
    %27 = vector.multi_reduction <add>, %26, %cst_10 [1, 2] : vector<1x8x1xf32> to vector<1xf32>
    %28 = vector.shape_cast %27 : vector<1xf32> to vector<1x1x1xf32>
    %29 = vector.extract %28[0, 0, 0] : f32 from vector<1x1x1xf32>
    %c0_11 = arith.constant 0 : index
    %c0_12 = arith.constant 0 : index
    %30 = memref.load %arg4[%c0_11, %c0_12] : memref<1x1xf32, #tpu.memory_space<smem>>
    memref.store %29, %arg4[%c0_11, %c0_12] : memref<1x1xf32, #tpu.memory_space<smem>>
    return
  }
  func.func @transform_0(%arg0: i32) -> (i32, i32) {
    %c0_i32 = arith.constant 0 : i32
    %c0_i32_0 = arith.constant 0 : i32
    return %arg0, %c0_i32 : i32, i32
  }
  func.func @transform_1(%arg0: i32) -> (i32, i32) {
    %c0_i32 = arith.constant 0 : i32
    %c0_i32_0 = arith.constant 0 : i32
    return %arg0, %c0_i32 : i32, i32
  }
  func.func @transform_2(%arg0: i32) -> (i32, i32) {
    %c0_i32 = arith.constant 0 : i32
    %c0_i32_0 = arith.constant 0 : i32
    return %arg0, %c0_i32 : i32, i32
  }
  func.func @transform_3(%arg0: i32) -> (i32, i32) {
    %c0_i32 = arith.constant 0 : i32
    %c0_i32_0 = arith.constant 0 : i32
    return %arg0, %c0_i32 : i32, i32
  }
}

</mosaic_0001>

<llo_original>
// kernel: tpu_custom_call.1
$region0: #{tpu_custom_call.1}
  #allocation0 [shape = 'u32[]', space=smem, size = 0x4, offset = 0x4, fixed_abs, tag = 'smem constant byte address 0x4 - core index']
  #allocation1 [shape = 'u32[144,128]{1,0:T(1,128)}', space=vmem, size = 0x12000, scoped, tag = 'internal scratch']
  %s0 = inlined_call_operand.vmem [shape: f32[8,128], index: 0, kind: input, shape index: {}]
  %s1 = inlined_call_operand.hbm [shape: f32[8,128], index: 1, kind: input, shape index: {}]
  %s2 = inlined_call_operand.vmem [shape: f32[8,1], index: 2, kind: input, shape index: {}]
  %s3 = inlined_call_operand.hbm [shape: f32[1,1], index: 3, kind: output, shape index: {}]
  %s4 = sld [smem:[#allocation0]]
  $region26: #{tpu_custom_call.1} parent=0
    _
  %s6 = ssub.s32 1, %s4
  %s7 = scalar_select 0, %s6, %s4
  $region1: #{tpu_custom_call.1} parent=0
    #allocation2 [shape = 'u8[4096]{0}', space=vmem, size = 0x1000, scoped, tag = 'input window, operand 1, single buffered']
    #allocation3 [shape = 's32[1]{0}', space=sflag, size = 0x4, scoped, tag = 'scoped memory for tpu_custom_call.1']
    #allocation4 [shape = 's32[1]{0}', space=sflag, size = 0x4, scoped, tag = 'scoped memory for tpu_custom_call.1']
    #allocation5 [shape = 'u8[512]{0}', space=smem, size = 0x200, scoped, tag = 'output window, operand 0, single buffered']
    %8 = vsyncpa [#allocation3], 0
    %9 = vsyncpa [#allocation4], 0
    // Predicated region
    $region2: #{tpu_custom_call.1} parent=1 // pred_check
      _
    $region3: #{tpu_custom_call.1} parent=1 // pred_check_branch
      %11 = sbr.rel (0) target = $region5
    $region4: #{tpu_custom_call.1} parent=1 // pred_region
      _
    $region5: #{tpu_custom_call.1} parent=1 // pred_fallthru
      _
    // Predicated region
    $region6: #{tpu_custom_call.1} parent=1 // pred_check
      _
    $region7: #{tpu_custom_call.1} parent=1 // pred_check_branch
      %13 = sbr.rel (0) target = $region9
    $region8: #{tpu_custom_call.1} parent=1 // pred_region
      %s15 = ssub.s32 128, 128
      %16 = vsyncadd [#allocation3], %s15
      %s18 = sshll.u32 [#allocation2], 4
      %s19 = int_to_ptr.vmem [resolvable:$true] %s18
      %21 = dma.hbm_to_vmem [thread:$0]  %s1, 128, %s19, [#allocation3]
    $region9: #{tpu_custom_call.1} parent=1 // pred_fallthru
      _
    // Predicated region
    $region10: #{tpu_custom_call.1} parent=1 // pred_check
      _
    $region11: #{tpu_custom_call.1} parent=1 // pred_check_branch
      %23 = sbr.rel (0) target = $region13
    $region12: #{tpu_custom_call.1} parent=1 // pred_region
      _
    $region13: #{tpu_custom_call.1} parent=1 // pred_fallthru
      _
    // Predicated region
    $region14: #{tpu_custom_call.1} parent=1 // pred_check
      _
    $region15: #{tpu_custom_call.1} parent=1 // pred_check_branch
      %25 = sbr.rel (0) target = $region17
    $region16: #{tpu_custom_call.1} parent=1 // pred_region
      %26 = dma.done [#allocation3], 128
    $region17: #{tpu_custom_call.1} parent=1 // pred_fallthru
      _
    %v27 = vld [vmem:[%s0] sm:$0xff]
    %v28 = vld [vmem:[#allocation2] sm:$0xff]
    %v29 = vld [vmem:[%s2] sm:$0xff]
    %v30 = vsub.f32 %v27, %v28
    %v31 = vmul.f32 %v30, %v30
    %32 = vadd.xlane.f32.xlu0 %v31
    %v33 = vpop.xlane.xlu0 %32
    %v34 = vrsqrt.pop %v33
    %v35 = vmul.f32 %v33, %v34
    %vm36 = vcmp.eq.f32.partialorder %v33, inf
    %v37 = vsel %vm36, %v33, %v35
    %vm38 = vcmp.eq.f32.partialorder %v33, 0.0
    %v39 = vand.u32 %v33, 2147483648
    %v40 = vsel %vm38, %v39, %v37
    %v41 = vsub.f32 1.0, %v40
    %v42 = vmax.f32 %v41, 0.0
    %v43 = vmul.f32 %v29, %v33
    %v44 = vsub.f32 1.0, %v29
    %v45 = vmul.f32 %v42, %v42
    %v46 = vmul.f32 %v44, %v45
    %v47 = vadd.f32 %v43, %v46
    %s48 = smul.u32 0, 8
    %v49 = vlaneseq
    %v50 = vshrl.u32 %v49, 7
    %v51 = vstv %s48
    %v52 = vadd.s32 %v51, %v50
    %vm53 = vcmp.lt.s32.totalorder %v52, 8
    %v54 = vsel %vm53, %v47, 0.0
    %vm55 = vcmask 7168
    %v56 = vsel %vm55, %v54, 0.0
    %57 = vadd.xlane.f32.xlu0 %v56
    %v58 = vpop.xlane.xlu0 %57
    %v59 = vrot.slane %v58, 4
    %v60 = vadd.f32 %v58, %v59
    %v61 = vrot.slane %v60, 2
    %v62 = vadd.f32 %v60, %v61
    %v63 = vrot.slane %v62, 1
    %v64 = vadd.f32 %v62, %v63
    %s65 = vtos %v64
    %s66 = scalar_lea.smem [#allocation5], 0
    %67 = sst [smem:[%s66]] %s65
    // Predicated region
    $region18: #{tpu_custom_call.1} parent=1 // pred_check
      _
    $region19: #{tpu_custom_call.1} parent=1 // pred_check_branch
      %69 = sbr.rel (0) target = $region21
    $region20: #{tpu_custom_call.1} parent=1 // pred_region
      %s71 = ssub.s32 16, 16
      %72 = vsyncadd [#allocation4], %s71
      %75 = dma.smem_to_hbm [#allocation5], 16, %s3, [#allocation4]
    $region21: #{tpu_custom_call.1} parent=1 // pred_fallthru
      _
    // Predicated region
    $region22: #{tpu_custom_call.1} parent=1 // pred_check
      _
    $region23: #{tpu_custom_call.1} parent=1 // pred_check_branch
      %77 = sbr.rel (0) target = $region25
    $region24: #{tpu_custom_call.1} parent=1 // pred_region
      %78 = dma.done [#allocation4], 16
    $region25: #{tpu_custom_call.1} parent=1 // pred_fallthru
      _
    %79 = sfence
    %80 = vsyncpa [#allocation3], 1
    %81 = vsyncpa [#allocation4], 1

</llo_original>
